<compile_context>
chip_gen: v7x
topology: tpu7x:2x2x1
jax: 0.10.0
libtpu: 0.0.40
codegen_flags: <defaults>
</compile_context>

<pallas_src>
import jax
import jax.numpy as jnp
from jax.experimental import pallas as pl
from jax.experimental.pallas import tpu as pltpu


def _round_up(n, m):
    return ((n + m - 1) // m) * m


def _pad_axis(a, axis, target):
    pad = target - a.shape[axis]
    if pad == 0:
        return a
    widths = [(0, 0)] * a.ndim
    widths[axis] = (0, pad)
    return jnp.pad(a, widths)


def _mlp_kernel(x_ref, w1_ref, b1_ref, w2_ref, b2_ref, o_ref):
    # fc1: x @ W1 + b1, ReLU.  bf16 MXU inputs, f32 accumulation.
    h = jnp.dot(x_ref[...], w1_ref[...], preferred_element_type=jnp.float32)
    h = jnp.maximum(h + b1_ref[...], 0.0)          # bias + ReLU: VPU co-issue
    # fc2: h @ W2 + b2 (h downcast to bf16 for the MXU, still f32 accumulate).
    o = jnp.dot(h.astype(w2_ref.dtype), w2_ref[...],
                preferred_element_type=jnp.float32)
    o_ref[...] = (o + b2_ref[...]).astype(o_ref.dtype)


def vanilla_net_forward(x, w1, b1, w2, b2):
    """Fused two-layer MLP forward.

    x : (B, 1280)                      activations
    w1: (1280, H),  b1: (H,)           fc1, stored pre-transposed (in, out)
    w2: (H, out),   b2: (out,)         fc2, stored pre-transposed (in, out)
    Returns (B, out) float32, matching relu(x @ w1 + b1) @ w2 + b2.
    """
    B, in_dim = x.shape
    H = w1.shape[1]
    out_dim = w2.shape[1]

    # Pad every contracting / lane dimension to hardware-friendly multiples.
    in_p = _round_up(in_dim, 128)
    h_p = _round_up(H, 128)
    out_p = _round_up(out_dim, 128)        # lane-dense output: no masked vst

    # Batch tile: 256 rows (full MXU M on v6e/v7x); small batches use a single
    # tile rounded up to the 8-sublane granule.
    tm = 256 if B >= 256 else max(8, _round_up(B, 8))
    b_p = _round_up(B, tm)

    # bf16 weights/activations -> half the HBM traffic; zero padding keeps the
    # math identical to the unpadded reference (padded hidden cols give 0 after
    # ReLU and hit zero rows of w2).
    x_p = _pad_axis(_pad_axis(x, 0, b_p), 1, in_p).astype(jnp.bfloat16)
    w1_p = _pad_axis(_pad_axis(w1, 0, in_p), 1, h_p).astype(jnp.bfloat16)
    w2_p = _pad_axis(_pad_axis(w2, 0, h_p), 1, out_p).astype(jnp.bfloat16)
    b1_p = _pad_axis(b1, 0, h_p).reshape(1, h_p).astype(jnp.float32)
    b2_p = _pad_axis(b2, 0, out_p).reshape(1, out_p).astype(jnp.float32)

    grid = (b_p // tm,)

    out = pl.pallas_call(
        _mlp_kernel,
        out_shape=jax.ShapeDtypeStruct((b_p, out_p), jnp.float32),
        grid_spec=pltpu.PrefetchScalarGridSpec(
            num_scalar_prefetch=0,
            grid=grid,
            in_specs=[
                pl.BlockSpec((tm, in_p), lambda i: (i, 0)),    # x: batch-tiled
                pl.BlockSpec((in_p, h_p), lambda i: (0, 0)),   # w1: VMEM-resident
                pl.BlockSpec((1, h_p), lambda i: (0, 0)),      # b1
                pl.BlockSpec((h_p, out_p), lambda i: (0, 0)),  # w2: VMEM-resident
                pl.BlockSpec((1, out_p), lambda i: (0, 0)),    # b2
            ],
            out_specs=pl.BlockSpec((tm, out_p), lambda i: (i, 0)),
        ),
        compiler_params=pltpu.CompilerParams(
            # Batch tiles are independent -> shard across both TCs on v7x.
            dimension_semantics=("parallel",),
            # Explicit budget: above v5e's 16 MiB default, under v7x's 64 MiB phys.
            vmem_limit_bytes=32 * 1024 * 1024,
        ),
    )(x_p, w1_p, b1_p, w2_p, b2_p)

    # TODO(synk): for H >= ~4096, single-buffer the weight BlockSpecs
    # (pipeline_mode=pl.Buffered(1)) or K-tile with a pl.when accumulator so the
    # resident weights fit v7x's 64 MiB VMEM.

    return out[:B, :out_dim]


def init_params(key, in_dim, hidden_dim, out_dim, dtype=jnp.float32):
    """Deterministic init mimicking nn.Linear's uniform(-1/sqrt(fan_in), +)."""
    k1, k2, k3, k4 = jax.random.split(key, 4)
    bound1 = 1.0 / jnp.sqrt(in_dim)
    bound2 = 1.0 / jnp.sqrt(hidden_dim)
    # Stored pre-transposed: (in_features, out_features).
    w1 = jax.random.uniform(k1, (in_dim, hidden_dim), dtype, -bound1, bound1)
    b1 = jax.random.uniform(k2, (hidden_dim,), dtype, -bound1, bound1)
    w2 = jax.random.uniform(k3, (hidden_dim, out_dim), dtype, -bound2, bound2)
    b2 = jax.random.uniform(k4, (out_dim,), dtype, -bound2, bound2)
    return w1, b1, w2, b2


if __name__ == "__main__":
    key = jax.random.PRNGKey(0)
    kx, kp = jax.random.split(key)

    B, IN_DIM, HIDDEN, OUT = 8, 1280, 128, 64
    dtype = jnp.float32

    x = jax.random.normal(kx, (B, IN_DIM), dtype)
    w1, b1, w2, b2 = init_params(kp, IN_DIM, HIDDEN, OUT, dtype)

    out = vanilla_net_forward(x, w1, b1, w2, b2)
    out = jax.block_until_ready(out)
    assert out.shape == (B, OUT)

    # Reference with the same bf16 weight/activation casts + f32 accumulation.
    xb = x.astype(jnp.bfloat16)
    w1b = w1.astype(jnp.bfloat16)
    w2b = w2.astype(jnp.bfloat16)
    h_ref = jnp.maximum(
        jnp.dot(xb, w1b, preferred_element_type=jnp.float32) + b1, 0.0)
    ref = jnp.dot(h_ref.astype(jnp.bfloat16), w2b,
                  preferred_element_type=jnp.float32) + b2

    err = float(jnp.max(jnp.abs(out - ref)))
    assert jnp.allclose(out, ref, atol=2e-2, rtol=2e-2), err

    print("KERNEL_OK")
</pallas_src>

<mosaic_0001>
module attributes {stable_mosaic.version = 11 : i64} {
  func.func @_mlp_kernel(%arg0: i32, %arg1: memref<8x1280xbf16, #tpu.memory_space<vmem>>, %arg2: memref<1280x128xbf16, #tpu.memory_space<vmem>>, %arg3: memref<1x128xf32, #tpu.memory_space<vmem>>, %arg4: memref<128x128xbf16, #tpu.memory_space<vmem>>, %arg5: memref<1x128xf32, #tpu.memory_space<vmem>>, %arg6: memref<8x128xf32, #tpu.memory_space<vmem>>) attributes {dimension_semantics = [#tpu.dimension_semantics<parallel>], iteration_bounds = array<i64: 1>, scalar_prefetch = 0 : i64, scratch_operands = 0 : i64, tpu.core_type = #tpu.core_type<tc>, window_params = [{transform_indices = @transform_0, window_bounds = array<i64: 8, 1280>}, {pipeline_mode = #tpu.pipeline_mode<synchronous>, transform_indices = @transform_1, window_bounds = array<i64: 1280, 128>}, {pipeline_mode = #tpu.pipeline_mode<synchronous>, transform_indices = @transform_2, window_bounds = array<i64: 1, 128>}, {pipeline_mode = #tpu.pipeline_mode<synchronous>, transform_indices = @transform_3, window_bounds = array<i64: 128, 128>}, {pipeline_mode = #tpu.pipeline_mode<synchronous>, transform_indices = @transform_4, window_bounds = array<i64: 1, 128>}, {transform_indices = @transform_5, window_bounds = array<i64: 8, 128>}]} {
    %c0 = arith.constant 0 : index
    %c0_0 = arith.constant 0 : index
    %0 = vector.load %arg1[%c0, %c0_0] : memref<8x1280xbf16, #tpu.memory_space<vmem>>, vector<8x1280xbf16>
    %c0_1 = arith.constant 0 : index
    %c0_2 = arith.constant 0 : index
    %1 = vector.load %arg2[%c0_1, %c0_2] : memref<1280x128xbf16, #tpu.memory_space<vmem>>, vector<1280x128xbf16>
    %cst = arith.constant dense<0.000000e+00> : vector<8x128xf32>
    %2 = tpu.matmul %0, %1, %cst {dimension_numbers = #tpu.dot_dimension_numbers<[1], [0], [0], [1], [0, 0, 1, 1], [], []>} : vector<8x1280xbf16>, vector<1280x128xbf16>, vector<8x128xf32> -> vector<8x128xf32>
    %c0_3 = arith.constant 0 : index
    %c0_4 = arith.constant 0 : index
    %3 = vector.load %arg3[%c0_3, %c0_4] : memref<1x128xf32, #tpu.memory_space<vmem>>, vector<1x128xf32>
    %4 = vector.broadcast %3 : vector<1x128xf32> to vector<8x128xf32>
    %5 = arith.addf %2, %4 : vector<8x128xf32>
    %cst_5 = arith.constant 0.000000e+00 : f32
    %6 = vector.broadcast %cst_5 : f32 to vector<8x128xf32>
    %7 = arith.maximumf %5, %6 : vector<8x128xf32>
    %8 = arith.truncf %7 : vector<8x128xf32> to vector<8x128xbf16>
    %c0_6 = arith.constant 0 : index
    %c0_7 = arith.constant 0 : index
    %9 = vector.load %arg4[%c0_6, %c0_7] : memref<128x128xbf16, #tpu.memory_space<vmem>>, vector<128x128xbf16>
    %cst_8 = arith.constant dense<0.000000e+00> : vector<8x128xf32>
    %10 = tpu.matmul %8, %9, %cst_8 {dimension_numbers = #tpu.dot_dimension_numbers<[1], [0], [0], [1], [0, 0, 1, 1], [], []>} : vector<8x128xbf16>, vector<128x128xbf16>, vector<8x128xf32> -> vector<8x128xf32>
    %c0_9 = arith.constant 0 : index
    %c0_10 = arith.constant 0 : index
    %11 = vector.load %arg5[%c0_9, %c0_10] : memref<1x128xf32, #tpu.memory_space<vmem>>, vector<1x128xf32>
    %12 = vector.broadcast %11 : vector<1x128xf32> to vector<8x128xf32>
    %13 = arith.addf %10, %12 : vector<8x128xf32>
    %c0_11 = arith.constant 0 : index
    %c0_12 = arith.constant 0 : index
    %14 = vector.load %arg6[%c0_11, %c0_12] : memref<8x128xf32, #tpu.memory_space<vmem>>, vector<8x128xf32>
    tpu.vector_store %arg6[%c0_11, %c0_12], %13 {strides = array<i32>} : memref<8x128xf32, #tpu.memory_space<vmem>>, vector<8x128xf32>,
    return
  }
  func.func @transform_0(%arg0: i32) -> (i32, i32) {
    %c0_i32 = arith.constant 0 : i32
    %c0_i32_0 = arith.constant 0 : i32
    return %arg0, %c0_i32 : i32, i32
  }
  func.func @transform_1(%arg0: i32) -> (i32, i32) {
    %c0_i32 = arith.constant 0 : i32
    %c0_i32_0 = arith.constant 0 : i32
    %c0_i32_1 = arith.constant 0 : i32
    return %c0_i32, %c0_i32_0 : i32, i32
  }
  func.func @transform_2(%arg0: i32) -> (i32, i32) {
    %c0_i32 = arith.constant 0 : i32
    %c0_i32_0 = arith.constant 0 : i32
    %c0_i32_1 = arith.constant 0 : i32
    return %c0_i32, %c0_i32_0 : i32, i32
  }
  func.func @transform_3(%arg0: i32) -> (i32, i32) {
    %c0_i32 = arith.constant 0 : i32
    %c0_i32_0 = arith.constant 0 : i32
    %c0_i32_1 = arith.constant 0 : i32
    return %c0_i32, %c0_i32_0 : i32, i32
  }
  func.func @transform_4(%arg0: i32) -> (i32, i32) {
    %c0_i32 = arith.constant 0 : i32
    %c0_i32_0 = arith.constant 0 : i32
    %c0_i32_1 = arith.constant 0 : i32
    return %c0_i32, %c0_i32_0 : i32, i32
  }
  func.func @transform_5(%arg0: i32) -> (i32, i32) {
    %c0_i32 = arith.constant 0 : i32
    %c0_i32_0 = arith.constant 0 : i32
    return %arg0, %c0_i32 : i32, i32
  }
}

</mosaic_0001>

<llo_original>
// kernel: tpu_custom_call.1
$region0: #{tpu_custom_call.1}
  #allocation0 [shape = 'u32[]', space=smem, size = 0x4, offset = 0x4, fixed_abs, tag = 'smem constant byte address 0x4 - core index']
  #allocation1 [shape = 'u32[144,128]{1,0:T(1,128)}', space=vmem, size = 0x12000, scoped, tag = 'internal scratch']
  %s0 = inlined_call_operand.hbm [shape: bf16[8,1280], index: 0, kind: input, shape index: {}]
  %s1 = inlined_call_operand.hbm [shape: bf16[1280,128], index: 1, kind: input, shape index: {}]
  %s2 = inlined_call_operand.vmem [shape: f32[1,128], index: 2, kind: input, shape index: {}]
  %s3 = inlined_call_operand.hbm [shape: bf16[128,128], index: 3, kind: input, shape index: {}]
  %s4 = inlined_call_operand.vmem [shape: f32[1,128], index: 4, kind: input, shape index: {}]
  %s5 = inlined_call_operand.hbm [shape: f32[8,128], index: 5, kind: output, shape index: {}]
  %s6 = sld [smem:[#allocation0]]
  $region42: #{tpu_custom_call.1} parent=0
    _
  %s8 = ssub.s32 1, %s6
  %s9 = scalar_select 0, %s8, %s6
  $region1: #{tpu_custom_call.1} parent=0
    #allocation2 [shape = 'u8[20480]{0}', space=vmem, size = 0x5000, scoped, tag = 'input window, operand 0, single buffered']
    #allocation3 [shape = 's32[1]{0}', space=sflag, size = 0x4, scoped, tag = 'scoped memory for tpu_custom_call.1']
    #allocation4 [shape = 's32[1]{0}', space=sflag, size = 0x4, scoped, tag = 'scoped memory for tpu_custom_call.1']
    #allocation5 [shape = 'u8[327680]{0}', space=vmem, size = 0x50000, scoped, tag = 'input window, operand 1, single buffered']
    #allocation6 [shape = 's32[1]{0}', space=sflag, size = 0x4, scoped, tag = 'scoped memory for tpu_custom_call.1']
    #allocation7 [shape = 'u8[32768]{0}', space=vmem, size = 0x8000, scoped, tag = 'input window, operand 3, single buffered']
    #allocation8 [shape = 'u8[4096]{0}', space=vmem, size = 0x1000, scoped, tag = 'output window, operand 0, single buffered']
    %10 = vsyncpa [#allocation3], 0
    %11 = vsyncpa [#allocation6], 0
    %12 = vsyncpa [#allocation4], 0
    // Predicated region
    $region2: #{tpu_custom_call.1} parent=1 // pred_check
      _
    $region3: #{tpu_custom_call.1} parent=1 // pred_check_branch
      %14 = sbr.rel (0) target = $region5
    $region4: #{tpu_custom_call.1} parent=1 // pred_region
      %s16 = ssub.s32 640, 640
      %17 = vsyncadd [#allocation3], %s16
      %s19 = sshll.u32 [#allocation2], 4
      %s20 = int_to_ptr.vmem [resolvable:$true] %s19
      %22 = dma.hbm_to_vmem [thread:$0]  %s0, 640, %s20, [#allocation3]
    $region5: #{tpu_custom_call.1} parent=1 // pred_fallthru
      _
    // Predicated region
    $region6: #{tpu_custom_call.1} parent=1 // pred_check
      _
    $region7: #{tpu_custom_call.1} parent=1 // pred_check_branch
      %24 = sbr.rel (0) target = $region9
    $region8: #{tpu_custom_call.1} parent=1 // pred_region
      %s26 = ssub.s32 10240, 10240
      %27 = vsyncadd [#allocation6], %s26
      %s28 = sshll.u32 [#allocation5], 4
      %s29 = int_to_ptr.vmem [resolvable:$true] %s28
      %34 = dma.hbm_to_vmem [thread:$0]  %s1, 10240, %s29, [#allocation6], 64, 64, 4
    $region9: #{tpu_custom_call.1} parent=1 // pred_fallthru
      _
    // Predicated region
    $region10: #{tpu_custom_call.1} parent=1 // pred_check
      _
    $region11: #{tpu_custom_call.1} parent=1 // pred_check_branch
      %36 = sbr.rel (0) target = $region13
    $region12: #{tpu_custom_call.1} parent=1 // pred_region
      _
    $region13: #{tpu_custom_call.1} parent=1 // pred_fallthru
      _
    // Predicated region
    $region14: #{tpu_custom_call.1} parent=1 // pred_check
      _
    $region15: #{tpu_custom_call.1} parent=1 // pred_check_branch
      %38 = sbr.rel (0) target = $region17
    $region16: #{tpu_custom_call.1} parent=1 // pred_region
      %s40 = ssub.s32 1024, 1024
      %41 = vsyncadd [#allocation6], %s40
      %s42 = sshll.u32 [#allocation7], 4
      %s43 = int_to_ptr.vmem [resolvable:$true] %s42
      %48 = dma.hbm_to_vmem [thread:$0]  %s3, 1024, %s43, [#allocation6], 64, 64, 4
    $region17: #{tpu_custom_call.1} parent=1 // pred_fallthru
      _
    // Predicated region
    $region18: #{tpu_custom_call.1} parent=1 // pred_check
      _
    $region19: #{tpu_custom_call.1} parent=1 // pred_check_branch
      %50 = sbr.rel (0) target = $region21
    $region20: #{tpu_custom_call.1} parent=1 // pred_region
      _
    $region21: #{tpu_custom_call.1} parent=1 // pred_fallthru
      _
    // Predicated region
    $region22: #{tpu_custom_call.1} parent=1 // pred_check
      _
    $region23: #{tpu_custom_call.1} parent=1 // pred_check_branch
      %52 = sbr.rel (0) target = $region25
    $region24: #{tpu_custom_call.1} parent=1 // pred_region
      %53 = dma.done [#allocation3], 640
    $region25: #{tpu_custom_call.1} parent=1 // pred_fallthru
      _
    // Predicated region
    $region26: #{tpu_custom_call.1} parent=1 // pred_check
      _
    $region27: #{tpu_custom_call.1} parent=1 // pred_check_branch
      %55 = sbr.rel (0) target = $region29
    $region28: #{tpu_custom_call.1} parent=1 // pred_region
      %56 = dma.done [#allocation6], 10240
    $region29: #{tpu_custom_call.1} parent=1 // pred_fallthru
      _
    // Predicated region
    $region30: #{tpu_custom_call.1} parent=1 // pred_check
      _
    $region31: #{tpu_custom_call.1} parent=1 // pred_check_branch
      %58 = sbr.rel (0) target = $region33
    $region32: #{tpu_custom_call.1} parent=1 // pred_region
      %59 = dma.done [#allocation6], 1024
    $region33: #{tpu_custom_call.1} parent=1 // pred_fallthru
      _
    %v61 = vld [vmem:[#allocation2] sm:$0xff]
    %v62 = vld [vmem:[#allocation2 + $0x8] sm:$0xff]
    %v63 = vld [vmem:[#allocation2 + $0x10] sm:$0xff]
    %v64 = vld [vmem:[#allocation2 + $0x18] sm:$0xff]
    %v65 = vld [vmem:[#allocation2 + $0x20] sm:$0xff]
    %v66 = vld [vmem:[#allocation5] sm:$0xf]
    %v67 = vld [vmem:[#allocation5 + $0x4] sm:$0xf]
    %v68 = vld [vmem:[#allocation5 + $0x8] sm:$0xf]
    %v69 = vld [vmem:[#allocation5 + $0xc] sm:$0xf]
    %v70 = vld [vmem:[#allocation5 + $0x10] sm:$0xf]
    %v71 = vld [vmem:[#allocation5 + $0x14] sm:$0xf]
    %v72 = vld [vmem:[#allocation5 + $0x18] sm:$0xf]
    %v73 = vld [vmem:[#allocation5 + $0x1c] sm:$0xf]
    %v74 = vld [vmem:[#allocation5 + $0x20] sm:$0xf]
    %v75 = vld [vmem:[#allocation5 + $0x24] sm:$0xf]
    %v76 = vld [vmem:[#allocation5 + $0x28] sm:$0xf]
    %v77 = vld [vmem:[#allocation5 + $0x2c] sm:$0xf]
    %v78 = vld [vmem:[#allocation5 + $0x30] sm:$0xf]
    %v79 = vld [vmem:[#allocation5 + $0x34] sm:$0xf]
    %v80 = vld [vmem:[#allocation5 + $0x38] sm:$0xf]
    %v81 = vld [vmem:[#allocation5 + $0x3c] sm:$0xf]
    %v82 = vld [vmem:[#allocation5 + $0x40] sm:$0xf]
    %v83 = vld [vmem:[#allocation5 + $0x44] sm:$0xf]
    %v84 = vld [vmem:[#allocation5 + $0x48] sm:$0xf]
    %v85 = vld [vmem:[#allocation5 + $0x4c] sm:$0xf]
    %v86 = vld [vmem:[#allocation5 + $0x50] sm:$0xf]
    %v87 = vld [vmem:[#allocation5 + $0x54] sm:$0xf]
    %v88 = vld [vmem:[#allocation5 + $0x58] sm:$0xf]
    %v89 = vld [vmem:[#allocation5 + $0x5c] sm:$0xf]
    %v90 = vld [vmem:[#allocation5 + $0x60] sm:$0xf]
    %v91 = vld [vmem:[#allocation5 + $0x64] sm:$0xf]
    %v92 = vld [vmem:[#allocation5 + $0x68] sm:$0xf]
    %v93 = vld [vmem:[#allocation5 + $0x6c] sm:$0xf]
    %v94 = vld [vmem:[#allocation5 + $0x70] sm:$0xf]
    %v95 = vld [vmem:[#allocation5 + $0x74] sm:$0xf]
    %v96 = vld [vmem:[#allocation5 + $0x78] sm:$0xf]
    %v97 = vld [vmem:[#allocation5 + $0x7c] sm:$0xf]
    %v98 = vld [vmem:[#allocation5 + $0x80] sm:$0xf]
    %v99 = vld [vmem:[#allocation5 + $0x84] sm:$0xf]
    %v100 = vld [vmem:[#allocation5 + $0x88] sm:$0xf]
    %v101 = vld [vmem:[#allocation5 + $0x8c] sm:$0xf]
    %v102 = vld [vmem:[#allocation5 + $0x90] sm:$0xf]
    %v103 = vld [vmem:[#allocation5 + $0x94] sm:$0xf]
    %v104 = vld [vmem:[#allocation5 + $0x98] sm:$0xf]
    %v105 = vld [vmem:[#allocation5 + $0x9c] sm:$0xf]
    %v106 = vld [vmem:[#allocation5 + $0xa0] sm:$0xf]
    %v107 = vld [vmem:[#allocation5 + $0xa4] sm:$0xf]
    %v108 = vld [vmem:[#allocation5 + $0xa8] sm:$0xf]
    %v109 = vld [vmem:[#allocation5 + $0xac] sm:$0xf]
    %v110 = vld [vmem:[#allocation5 + $0xb0] sm:$0xf]
    %v111 = vld [vmem:[#allocation5 + $0xb4] sm:$0xf]
    %v112 = vld [vmem:[#allocation5 + $0xb8] sm:$0xf]
    %v113 = vld [vmem:[#allocation5 + $0xbc] sm:$0xf]
    %v114 = vld [vmem:[#allocation5 + $0xc0] sm:$0xf]
    %v115 = vld [vmem:[#allocation5 + $0xc4] sm:$0xf]
    %v116 = vld [vmem:[#allocation5 + $0xc8] sm:$0xf]
    %v117 = vld [vmem:[#allocation5 + $0xcc] sm:$0xf]
    %v118 = vld [vmem:[#allocation5 + $0xd0] sm:$0xf]
    %v119 = vld [vmem:[#allocation5 + $0xd4] sm:$0xf]
    %v120 = vld [vmem:[#allocation5 + $0xd8] sm:$0xf]
    %v121 = vld [vmem:[#allocation5 + $0xdc] sm:$0xf]
    %v122 = vld [vmem:[#allocation5 + $0xe0] sm:$0xf]
    %v123 = vld [vmem:[#allocation5 + $0xe4] sm:$0xf]
    %v124 = vld [vmem:[#allocation5 + $0xe8] sm:$0xf]
    %v125 = vld [vmem:[#allocation5 + $0xec] sm:$0xf]
    %v126 = vld [vmem:[#allocation5 + $0xf0] sm:$0xf]
    %v127 = vld [vmem:[#allocation5 + $0xf4] sm:$0xf]
    %v128 = vld [vmem:[#allocation5 + $0xf8] sm:$0xf]
    %v129 = vld [vmem:[#allocation5 + $0xfc] sm:$0xf]
    %v130 = vld [vmem:[#allocation5 + $0x100] sm:$0xf]
    %v131 = vld [vmem:[#allocation5 + $0x104] sm:$0xf]
    %v132 = vld [vmem:[#allocation5 + $0x108] sm:$0xf]
    %v133 = vld [vmem:[#allocation5 + $0x10c] sm:$0xf]
    %v134 = vld [vmem:[#allocation5 + $0x110] sm:$0xf]
    %v135 = vld [vmem:[#allocation5 + $0x114] sm:$0xf]
    %v136 = vld [vmem:[#allocation5 + $0x118] sm:$0xf]
    %v137 = vld [vmem:[#allocation5 + $0x11c] sm:$0xf]
    %v138 = vld [vmem:[#allocation5 + $0x120] sm:$0xf]
    %v139 = vld [vmem:[#allocation5 + $0x124] sm:$0xf]
    %v140 = vld [vmem:[#allocation5 + $0x128] sm:$0xf]
    %v141 = vld [vmem:[#allocation5 + $0x12c] sm:$0xf]
    %v142 = vld [vmem:[#allocation5 + $0x130] sm:$0xf]
    %v143 = vld [vmem:[#allocation5 + $0x134] sm:$0xf]
    %v144 = vld [vmem:[#allocation5 + $0x138] sm:$0xf]
    %v145 = vld [vmem:[#allocation5 + $0x13c] sm:$0xf]
    %v146 = vld [vmem:[#allocation5 + $0x140] sm:$0xf]
    %v147 = vld [vmem:[#allocation5 + $0x144] sm:$0xf]
    %v148 = vld [vmem:[#allocation5 + $0x148] sm:$0xf]
    %v149 = vld [vmem:[#allocation5 + $0x14c] sm:$0xf]
    %v150 = vld [vmem:[#allocation5 + $0x150] sm:$0xf]
    %v151 = vld [vmem:[#allocation5 + $0x154] sm:$0xf]
    %v152 = vld [vmem:[#allocation5 + $0x158] sm:$0xf]
    %v153 = vld [vmem:[#allocation5 + $0x15c] sm:$0xf]
    %v154 = vld [vmem:[#allocation5 + $0x160] sm:$0xf]
    %v155 = vld [vmem:[#allocation5 + $0x164] sm:$0xf]
    %v156 = vld [vmem:[#allocation5 + $0x168] sm:$0xf]
    %v157 = vld [vmem:[#allocation5 + $0x16c] sm:$0xf]
    %v158 = vld [vmem:[#allocation5 + $0x170] sm:$0xf]
    %v159 = vld [vmem:[#allocation5 + $0x174] sm:$0xf]
    %v160 = vld [vmem:[#allocation5 + $0x178] sm:$0xf]
    %v161 = vld [vmem:[#allocation5 + $0x17c] sm:$0xf]
    %v162 = vld [vmem:[#allocation5 + $0x180] sm:$0xf]
    %v163 = vld [vmem:[#allocation5 + $0x184] sm:$0xf]
    %v164 = vld [vmem:[#allocation5 + $0x188] sm:$0xf]
    %v165 = vld [vmem:[#allocation5 + $0x18c] sm:$0xf]
    %v166 = vld [vmem:[#allocation5 + $0x190] sm:$0xf]
    %v167 = vld [vmem:[#allocation5 + $0x194] sm:$0xf]
    %v168 = vld [vmem:[#allocation5 + $0x198] sm:$0xf]
    %v169 = vld [vmem:[#allocation5 + $0x19c] sm:$0xf]
    %v170 = vld [vmem:[#allocation5 + $0x1a0] sm:$0xf]
    %v171 = vld [vmem:[#allocation5 + $0x1a4] sm:$0xf]
    %v172 = vld [vmem:[#allocation5 + $0x1a8] sm:$0xf]
    %v173 = vld [vmem:[#allocation5 + $0x1ac] sm:$0xf]
    %v174 = vld [vmem:[#allocation5 + $0x1b0] sm:$0xf]
    %v175 = vld [vmem:[#allocation5 + $0x1b4] sm:$0xf]
    %v176 = vld [vmem:[#allocation5 + $0x1b8] sm:$0xf]
    %v177 = vld [vmem:[#allocation5 + $0x1bc] sm:$0xf]
    %v178 = vld [vmem:[#allocation5 + $0x1c0] sm:$0xf]
    %v179 = vld [vmem:[#allocation5 + $0x1c4] sm:$0xf]
    %v180 = vld [vmem:[#allocation5 + $0x1c8] sm:$0xf]
    %v181 = vld [vmem:[#allocation5 + $0x1cc] sm:$0xf]
    %v182 = vld [vmem:[#allocation5 + $0x1d0] sm:$0xf]
    %v183 = vld [vmem:[#allocation5 + $0x1d4] sm:$0xf]
    %v184 = vld [vmem:[#allocation5 + $0x1d8] sm:$0xf]
    %v185 = vld [vmem:[#allocation5 + $0x1dc] sm:$0xf]
    %v186 = vld [vmem:[#allocation5 + $0x1e0] sm:$0xf]
    %v187 = vld [vmem:[#allocation5 + $0x1e4] sm:$0xf]
    %v188 = vld [vmem:[#allocation5 + $0x1e8] sm:$0xf]
    %v189 = vld [vmem:[#allocation5 + $0x1ec] sm:$0xf]
    %v190 = vld [vmem:[#allocation5 + $0x1f0] sm:$0xf]
    %v191 = vld [vmem:[#allocation5 + $0x1f4] sm:$0xf]
    %v192 = vld [vmem:[#allocation5 + $0x1f8] sm:$0xf]
    %v193 = vld [vmem:[#allocation5 + $0x1fc] sm:$0xf]
    %v194 = vld [vmem:[#allocation5 + $0x200] sm:$0xf]
    %v195 = vld [vmem:[#allocation5 + $0x204] sm:$0xf]
    %v196 = vld [vmem:[#allocation5 + $0x208] sm:$0xf]
    %v197 = vld [vmem:[#allocation5 + $0x20c] sm:$0xf]
    %v198 = vld [vmem:[#allocation5 + $0x210] sm:$0xf]
    %v199 = vld [vmem:[#allocation5 + $0x214] sm:$0xf]
    %v200 = vld [vmem:[#allocation5 + $0x218] sm:$0xf]
    %v201 = vld [vmem:[#allocation5 + $0x21c] sm:$0xf]
    %v202 = vld [vmem:[#allocation5 + $0x220] sm:$0xf]
    %v203 = vld [vmem:[#allocation5 + $0x224] sm:$0xf]
    %v204 = vld [vmem:[#allocation5 + $0x228] sm:$0xf]
    %v205 = vld [vmem:[#allocation5 + $0x22c] sm:$0xf]
    %v206 = vld [vmem:[#allocation5 + $0x230] sm:$0xf]
    %v207 = vld [vmem:[#allocation5 + $0x234] sm:$0xf]
    %v208 = vld [vmem:[#allocation5 + $0x238] sm:$0xf]
    %v209 = vld [vmem:[#allocation5 + $0x23c] sm:$0xf]
    %v210 = vld [vmem:[#allocation5 + $0x240] sm:$0xf]
    %v211 = vld [vmem:[#allocation5 + $0x244] sm:$0xf]
    %v212 = vld [vmem:[#allocation5 + $0x248] sm:$0xf]
    %v213 = vld [vmem:[#allocation5 + $0x24c] sm:$0xf]
    %v214 = vld [vmem:[#allocation5 + $0x250] sm:$0xf]
    %v215 = vld [vmem:[#allocation5 + $0x254] sm:$0xf]
    %v216 = vld [vmem:[#allocation5 + $0x258] sm:$0xf]
    %v217 = vld [vmem:[#allocation5 + $0x25c] sm:$0xf]
    %v218 = vld [vmem:[#allocation5 + $0x260] sm:$0xf]
    %v219 = vld [vmem:[#allocation5 + $0x264] sm:$0xf]
    %v220 = vld [vmem:[#allocation5 + $0x268] sm:$0xf]
    %v221 = vld [vmem:[#allocation5 + $0x26c] sm:$0xf]
    %v222 = vld [vmem:[#allocation5 + $0x270] sm:$0xf]
    %v223 = vld [vmem:[#allocation5 + $0x274] sm:$0xf]
    %v224 = vld [vmem:[#allocation5 + $0x278] sm:$0xf]
    %v225 = vld [vmem:[#allocation5 + $0x27c] sm:$0xf]
    %v226 = vld [vmem:[%s2] sm:$0x1]
    %v228 = vlaneseq
    %v229 = vshrl.u32 %v228, 7
    %v230 = vsub.s32 0, %v229
    %v231 = vrot.slane %v226, %v230
    %v238 = vunpack.c.l.b16 %v61
    %v239 = vunpack.c.h.b16 %v61
    %v240 = vunpack.c.l.b16 %v62
    %v241 = vunpack.c.h.b16 %v62
    %v242 = vunpack.c.l.b16 %v63
    %v243 = vunpack.c.h.b16 %v63
    %v244 = vunpack.c.l.b16 %v64
    %v245 = vunpack.c.h.b16 %v64
    %v246 = vunpack.c.l.b16 %v65
    %v247 = vunpack.c.h.b16 %v65
    %v248 = vpack.c.b16 %v238, %v238
    %v249 = vpack.c.b16 %v239, %v239
    %v250 = vpack.c.b16 %v240, %v240
    %v251 = vpack.c.b16 %v241, %v241
    %v252 = vpack.c.b16 %v242, %v242
    %v253 = vpack.c.b16 %v243, %v243
    %v254 = vpack.c.b16 %v244, %v244
    %v255 = vpack.c.b16 %v245, %v245
    %v256 = vpack.c.b16 %v246, %v246
    %v257 = vpack.c.b16 %v247, %v247
    %v428 = vunpack.c.l.b16 %v66
    %v429 = vunpack.c.l.b16 %v67
    %v430 = vunpack.c.l.b16 %v68
    %v431 = vunpack.c.l.b16 %v69
    %v432 = vunpack.c.l.b16 %v70
    %v433 = vunpack.c.l.b16 %v71
    %v434 = vunpack.c.l.b16 %v72
    %v435 = vunpack.c.l.b16 %v73
    %v436 = vunpack.c.l.b16 %v74
    %v437 = vunpack.c.l.b16 %v75
    %v438 = vunpack.c.l.b16 %v76
    %v439 = vunpack.c.l.b16 %v77
    %v440 = vunpack.c.l.b16 %v78
    %v441 = vunpack.c.l.b16 %v79
    %v442 = vunpack.c.l.b16 %v80
    %v443 = vunpack.c.l.b16 %v81
    %v444 = vunpack.c.l.b16 %v82
    %v445 = vunpack.c.l.b16 %v83
    %v446 = vunpack.c.l.b16 %v84
    %v447 = vunpack.c.l.b16 %v85
    %v448 = vunpack.c.l.b16 %v86
    %v449 = vunpack.c.l.b16 %v87
    %v450 = vunpack.c.l.b16 %v88
    %v451 = vunpack.c.l.b16 %v89
    %v452 = vunpack.c.l.b16 %v90
    %v453 = vunpack.c.l.b16 %v91
    %v454 = vunpack.c.l.b16 %v92
    %v455 = vunpack.c.l.b16 %v93
    %v456 = vunpack.c.l.b16 %v94
    %v457 = vunpack.c.l.b16 %v95
    %v458 = vunpack.c.l.b16 %v96
    %v459 = vunpack.c.l.b16 %v97
    %v460 = vunpack.c.l.b16 %v98
    %v461 = vunpack.c.l.b16 %v99
    %v462 = vunpack.c.l.b16 %v100
    %v463 = vunpack.c.l.b16 %v101
    %v464 = vunpack.c.l.b16 %v102
    %v465 = vunpack.c.l.b16 %v103
    %v466 = vunpack.c.l.b16 %v104
    %v467 = vunpack.c.l.b16 %v105
    %v468 = vunpack.c.l.b16 %v106
    %v469 = vunpack.c.l.b16 %v107
    %v470 = vunpack.c.l.b16 %v108
    %v471 = vunpack.c.l.b16 %v109
    %v472 = vunpack.c.l.b16 %v110
    %v473 = vunpack.c.l.b16 %v111
    %v474 = vunpack.c.l.b16 %v112
    %v475 = vunpack.c.l.b16 %v113
    %v476 = vunpack.c.l.b16 %v114
    %v477 = vunpack.c.l.b16 %v115
    %v478 = vunpack.c.l.b16 %v116
    %v479 = vunpack.c.l.b16 %v117
    %v480 = vunpack.c.l.b16 %v118
    %v481 = vunpack.c.l.b16 %v119
    %v482 = vunpack.c.l.b16 %v120
    %v483 = vunpack.c.l.b16 %v121
    %v484 = vunpack.c.l.b16 %v122
    %v485 = vunpack.c.l.b16 %v123
    %v486 = vunpack.c.l.b16 %v124
    %v487 = vunpack.c.l.b16 %v125
    %v488 = vunpack.c.l.b16 %v126
    %v489 = vunpack.c.l.b16 %v127
    %v490 = vunpack.c.l.b16 %v128
    %v491 = vunpack.c.l.b16 %v129
    %v492 = vunpack.c.l.b16 %v130
    %v493 = vunpack.c.l.b16 %v131
    %v494 = vunpack.c.l.b16 %v132
    %v495 = vunpack.c.l.b16 %v133
    %v496 = vunpack.c.l.b16 %v134
    %v497 = vunpack.c.l.b16 %v135
    %v498 = vunpack.c.l.b16 %v136
    %v499 = vunpack.c.l.b16 %v137
    %v500 = vunpack.c.l.b16 %v138
    %v501 = vunpack.c.l.b16 %v139
    %v502 = vunpack.c.l.b16 %v140
    %v503 = vunpack.c.l.b16 %v141
    %v504 = vunpack.c.l.b16 %v142
    %v505 = vunpack.c.l.b16 %v143
    %v506 = vunpack.c.l.b16 %v144
    %v507 = vunpack.c.l.b16 %v145
    %v508 = vunpack.c.l.b16 %v146
    %v509 = vunpack.c.l.b16 %v147
    %v510 = vunpack.c.l.b16 %v148
    %v511 = vunpack.c.l.b16 %v149
    %v512 = vunpack.c.l.b16 %v150
    %v513 = vunpack.c.l.b16 %v151
    %v514 = vunpack.c.l.b16 %v152
    %v515 = vunpack.c.l.b16 %v153
    %v516 = vunpack.c.l.b16 %v154
    %v517 = vunpack.c.l.b16 %v155
    %v518 = vunpack.c.l.b16 %v156
    %v519 = vunpack.c.l.b16 %v157
    %v520 = vunpack.c.l.b16 %v158
    %v521 = vunpack.c.l.b16 %v159
    %v522 = vunpack.c.l.b16 %v160
    %v523 = vunpack.c.l.b16 %v161
    %v524 = vunpack.c.l.b16 %v162
    %v525 = vunpack.c.l.b16 %v163
    %v526 = vunpack.c.l.b16 %v164
    %v527 = vunpack.c.l.b16 %v165
    %v528 = vunpack.c.l.b16 %v166
    %v529 = vunpack.c.l.b16 %v167
    %v530 = vunpack.c.l.b16 %v168
    %v531 = vunpack.c.l.b16 %v169
    %v532 = vunpack.c.l.b16 %v170
    %v533 = vunpack.c.l.b16 %v171
    %v534 = vunpack.c.l.b16 %v172
    %v535 = vunpack.c.l.b16 %v173
    %v536 = vunpack.c.l.b16 %v174
    %v537 = vunpack.c.l.b16 %v175
    %v538 = vunpack.c.l.b16 %v176
    %v539 = vunpack.c.l.b16 %v177
    %v540 = vunpack.c.l.b16 %v178
    %v541 = vunpack.c.l.b16 %v179
    %v542 = vunpack.c.l.b16 %v180
    %v543 = vunpack.c.l.b16 %v181
    %v544 = vunpack.c.l.b16 %v182
    %v545 = vunpack.c.l.b16 %v183
    %v546 = vunpack.c.l.b16 %v184
    %v547 = vunpack.c.l.b16 %v185
    %v548 = vunpack.c.l.b16 %v186
    %v549 = vunpack.c.l.b16 %v187
    %v550 = vunpack.c.l.b16 %v188
    %v551 = vunpack.c.l.b16 %v189
    %v552 = vunpack.c.l.b16 %v190
    %v553 = vunpack.c.l.b16 %v191
    %v554 = vunpack.c.l.b16 %v192
    %v555 = vunpack.c.l.b16 %v193
    %v556 = vunpack.c.l.b16 %v194
    %v557 = vunpack.c.l.b16 %v195
    %v558 = vunpack.c.l.b16 %v196
    %v559 = vunpack.c.l.b16 %v197
    %v560 = vunpack.c.l.b16 %v198
    %v561 = vunpack.c.l.b16 %v199
    %v562 = vunpack.c.l.b16 %v200
    %v563 = vunpack.c.l.b16 %v201
    %v564 = vunpack.c.l.b16 %v202
    %v565 = vunpack.c.l.b16 %v203
    %v566 = vunpack.c.l.b16 %v204
    %v567 = vunpack.c.l.b16 %v205
    %v568 = vunpack.c.l.b16 %v206
    %v569 = vunpack.c.l.b16 %v207
    %v570 = vunpack.c.l.b16 %v208
    %v571 = vunpack.c.l.b16 %v209
    %v572 = vunpack.c.l.b16 %v210
    %v573 = vunpack.c.l.b16 %v211
    %v574 = vunpack.c.l.b16 %v212
    %v575 = vunpack.c.l.b16 %v213
    %v576 = vunpack.c.l.b16 %v214
    %v577 = vunpack.c.l.b16 %v215
    %v578 = vunpack.c.l.b16 %v216
    %v579 = vunpack.c.l.b16 %v217
    %v580 = vunpack.c.l.b16 %v218
    %v581 = vunpack.c.l.b16 %v219
    %v582 = vunpack.c.l.b16 %v220
    %v583 = vunpack.c.l.b16 %v221
    %v584 = vunpack.c.l.b16 %v222
    %v585 = vunpack.c.l.b16 %v223
    %v586 = vunpack.c.l.b16 %v224
    %v587 = vunpack.c.l.b16 %v225
    %v588 = vpack.c.b16 %v429, %v428
    %v589 = vpack.c.b16 %v431, %v430
    %v590 = vpack.c.b16 %v433, %v432
    %v591 = vpack.c.b16 %v435, %v434
    %v592 = vpack.c.b16 %v437, %v436
    %v593 = vpack.c.b16 %v439, %v438
    %v594 = vpack.c.b16 %v441, %v440
    %v595 = vpack.c.b16 %v443, %v442
    %v596 = vpack.c.b16 %v445, %v444
    %v597 = vpack.c.b16 %v447, %v446
    %v598 = vpack.c.b16 %v449, %v448
    %v599 = vpack.c.b16 %v451, %v450
    %v600 = vpack.c.b16 %v453, %v452
    %v601 = vpack.c.b16 %v455, %v454
    %v602 = vpack.c.b16 %v457, %v456
    %v603 = vpack.c.b16 %v459, %v458
    %v604 = vpack.c.b16 %v461, %v460
    %v605 = vpack.c.b16 %v463, %v462
    %v606 = vpack.c.b16 %v465, %v464
    %v607 = vpack.c.b16 %v467, %v466
    %v608 = vpack.c.b16 %v469, %v468
    %v609 = vpack.c.b16 %v471, %v470
    %v610 = vpack.c.b16 %v473, %v472
    %v611 = vpack.c.b16 %v475, %v474
    %v612 = vpack.c.b16 %v477, %v476
    %v613 = vpack.c.b16 %v479, %v478
    %v614 = vpack.c.b16 %v481, %v480
    %v615 = vpack.c.b16 %v483, %v482
    %v616 = vpack.c.b16 %v485, %v484
    %v617 = vpack.c.b16 %v487, %v486
    %v618 = vpack.c.b16 %v489, %v488
    %v619 = vpack.c.b16 %v491, %v490
    %v620 = vpack.c.b16 %v493, %v492
    %v621 = vpack.c.b16 %v495, %v494
    %v622 = vpack.c.b16 %v497, %v496
    %v623 = vpack.c.b16 %v499, %v498
    %v624 = vpack.c.b16 %v501, %v500
    %v625 = vpack.c.b16 %v503, %v502
    %v626 = vpack.c.b16 %v505, %v504
    %v627 = vpack.c.b16 %v507, %v506
    %v628 = vpack.c.b16 %v509, %v508
    %v629 = vpack.c.b16 %v511, %v510
    %v630 = vpack.c.b16 %v513, %v512
    %v631 = vpack.c.b16 %v515, %v514
    %v632 = vpack.c.b16 %v517, %v516
    %v633 = vpack.c.b16 %v519, %v518
    %v634 = vpack.c.b16 %v521, %v520
    %v635 = vpack.c.b16 %v523, %v522
    %v636 = vpack.c.b16 %v525, %v524
    %v637 = vpack.c.b16 %v527, %v526
    %v638 = vpack.c.b16 %v529, %v528
    %v639 = vpack.c.b16 %v531, %v530
    %v640 = vpack.c.b16 %v533, %v532
    %v641 = vpack.c.b16 %v535, %v534
    %v642 = vpack.c.b16 %v537, %v536
    %v643 = vpack.c.b16 %v539, %v538
    %v644 = vpack.c.b16 %v541, %v540
    %v645 = vpack.c.b16 %v543, %v542
    %v646 = vpack.c.b16 %v545, %v544
    %v647 = vpack.c.b16 %v547, %v546
    %v648 = vpack.c.b16 %v549, %v548
    %v649 = vpack.c.b16 %v551, %v550
    %v650 = vpack.c.b16 %v553, %v552
    %v651 = vpack.c.b16 %v555, %v554
    %v652 = vpack.c.b16 %v557, %v556
    %v653 = vpack.c.b16 %v559, %v558
    %v654 = vpack.c.b16 %v561, %v560
    %v655 = vpack.c.b16 %v563, %v562
    %v656 = vpack.c.b16 %v565, %v564
    %v657 = vpack.c.b16 %v567, %v566
    %v658 = vpack.c.b16 %v569, %v568
    %v659 = vpack.c.b16 %v571, %v570
    %v660 = vpack.c.b16 %v573, %v572
    %v661 = vpack.c.b16 %v575, %v574
    %v662 = vpack.c.b16 %v577, %v576
    %v663 = vpack.c.b16 %v579, %v578
    %v664 = vpack.c.b16 %v581, %v580
    %v665 = vpack.c.b16 %v583, %v582
    %v666 = vpack.c.b16 %v585, %v584
    %v667 = vpack.c.b16 %v587, %v586
    %748 = vmatprep.subr.bf16.mxu0 0
    %749 = vmatpush1.bf16.msra.mxu0 %v588
    %750 = vmatprep.subr.bf16.mxu0 0
    %751 = vmatpush1.bf16.msra.mxu0 %v589
    %752 = vmatprep.subr.bf16.mxu0 0
    %753 = vmatpush1.bf16.msra.mxu0 %v590
    %754 = vmatprep.subr.bf16.mxu0 0
    %755 = vmatpush1.bf16.msra.mxu0 %v591
    %756 = vmatprep.subr.bf16.mxu0 0
    %757 = vmatpush1.bf16.msra.mxu0 %v592
    %758 = vmatprep.subr.bf16.mxu0 0
    %759 = vmatpush1.bf16.msra.mxu0 %v593
    %760 = vmatprep.subr.bf16.mxu0 0
    %761 = vmatpush1.bf16.msra.mxu0 %v594
    %762 = vmatprep.subr.bf16.mxu0 0
    %763 = vmatpush1.bf16.msra.mxu0 %v595
    %764 = vmatprep.subr.bf16.mxu0 0
    %765 = vmatpush1.bf16.msra.mxu0 %v596
    %766 = vmatprep.subr.bf16.mxu0 0
    %767 = vmatpush1.bf16.msra.mxu0 %v597
    %768 = vmatprep.subr.bf16.mxu0 0
    %769 = vmatpush1.bf16.msra.mxu0 %v598
    %770 = vmatprep.subr.bf16.mxu0 0
    %771 = vmatpush1.bf16.msra.mxu0 %v599
    %772 = vmatprep.subr.bf16.mxu0 0
    %773 = vmatpush1.bf16.msra.mxu0 %v600
    %774 = vmatprep.subr.bf16.mxu0 0
    %775 = vmatpush1.bf16.msra.mxu0 %v601
    %776 = vmatprep.subr.bf16.mxu0 0
    %777 = vmatpush1.bf16.msra.mxu0 %v602
    %778 = vmatprep.subr.bf16.mxu0 0
    %779 = vmatpush1.bf16.msra.mxu0 %v603
    %780 = vmatprep.mubr.bf16.mxu0 %v249
    %781 = vmatmul.mubr.bf16.gmra.mrb[0].mxu0 %v248
    %v782 = vpop.f32.mrb[0].mxu0
    %v783 = vadd.f32 %v231, %v782
    %v784 = vpop.f32.mrb[0].mxu0
    %v785 = vpop.f32.mrb[0].mxu0
    %v786 = vpop.f32.mrb[0].mxu0
    %787 = vdwg.mxu0
    %788 = vmatprep.subr.bf16.mxu0 0
    %789 = vmatpush1.bf16.msra.mxu0 %v604
    %790 = vmatprep.subr.bf16.mxu0 0
    %791 = vmatpush1.bf16.msra.mxu0 %v605
    %792 = vmatprep.subr.bf16.mxu0 0
    %793 = vmatpush1.bf16.msra.mxu0 %v606
    %794 = vmatprep.subr.bf16.mxu0 0
    %795 = vmatpush1.bf16.msra.mxu0 %v607
    %796 = vmatprep.subr.bf16.mxu0 0
    %797 = vmatpush1.bf16.msra.mxu0 %v608
    %798 = vmatprep.subr.bf16.mxu0 0
    %799 = vmatpush1.bf16.msra.mxu0 %v609
    %800 = vmatprep.subr.bf16.mxu0 0
    %801 = vmatpush1.bf16.msra.mxu0 %v610
    %802 = vmatprep.subr.bf16.mxu0 0
    %803 = vmatpush1.bf16.msra.mxu0 %v611
    %804 = vmatprep.subr.bf16.mxu0 0
    %805 = vmatpush1.bf16.msra.mxu0 %v612
    %806 = vmatprep.subr.bf16.mxu0 0
    %807 = vmatpush1.bf16.msra.mxu0 %v613
    %808 = vmatprep.subr.bf16.mxu0 0
    %809 = vmatpush1.bf16.msra.mxu0 %v614
    %810 = vmatprep.subr.bf16.mxu0 0
    %811 = vmatpush1.bf16.msra.mxu0 %v615
    %812 = vmatprep.subr.bf16.mxu0 0
    %813 = vmatpush1.bf16.msra.mxu0 %v616
    %814 = vmatprep.subr.bf16.mxu0 0
    %815 = vmatpush1.bf16.msra.mxu0 %v617
    %816 = vmatprep.subr.bf16.mxu0 0
    %817 = vmatpush1.bf16.msra.mxu0 %v618
    %818 = vmatprep.subr.bf16.mxu0 0
    %819 = vmatpush1.bf16.msra.mxu0 %v619
    %820 = vmatprep.mubr.bf16.mxu0 %v251
    %821 = vmatmul.mubr.bf16.gmra.mrb[0].mxu0 %v250
    %v822 = vpop.f32.mrb[0].mxu0
    %v823 = vadd.f32 %v783, %v822
    %v824 = vpop.f32.mrb[0].mxu0
    %v825 = vpop.f32.mrb[0].mxu0
    %v826 = vpop.f32.mrb[0].mxu0
    %827 = vdwg.mxu0
    %828 = vmatprep.subr.bf16.mxu0 0
    %829 = vmatpush1.bf16.msra.mxu0 %v620
    %830 = vmatprep.subr.bf16.mxu0 0
    %831 = vmatpush1.bf16.msra.mxu0 %v621
    %832 = vmatprep.subr.bf16.mxu0 0
    %833 = vmatpush1.bf16.msra.mxu0 %v622
    %834 = vmatprep.subr.bf16.mxu0 0
    %835 = vmatpush1.bf16.msra.mxu0 %v623
    %836 = vmatprep.subr.bf16.mxu0 0
    %837 = vmatpush1.bf16.msra.mxu0 %v624
    %838 = vmatprep.subr.bf16.mxu0 0
    %839 = vmatpush1.bf16.msra.mxu0 %v625
    %840 = vmatprep.subr.bf16.mxu0 0
    %841 = vmatpush1.bf16.msra.mxu0 %v626
    %842 = vmatprep.subr.bf16.mxu0 0
    %843 = vmatpush1.bf16.msra.mxu0 %v627
    %844 = vmatprep.subr.bf16.mxu0 0
    %845 = vmatpush1.bf16.msra.mxu0 %v628
    %846 = vmatprep.subr.bf16.mxu0 0
    %847 = vmatpush1.bf16.msra.mxu0 %v629
    %848 = vmatprep.subr.bf16.mxu0 0
    %849 = vmatpush1.bf16.msra.mxu0 %v630
    %850 = vmatprep.subr.bf16.mxu0 0
    %851 = vmatpush1.bf16.msra.mxu0 %v631
    %852 = vmatprep.subr.bf16.mxu0 0
    %853 = vmatpush1.bf16.msra.mxu0 %v632
    %854 = vmatprep.subr.bf16.mxu0 0
    %855 = vmatpush1.bf16.msra.mxu0 %v633
    %856 = vmatprep.subr.bf16.mxu0 0
    %857 = vmatpush1.bf16.msra.mxu0 %v634
    %858 = vmatprep.subr.bf16.mxu0 0
    %859 = vmatpush1.bf16.msra.mxu0 %v635
    %860 = vmatprep.mubr.bf16.mxu0 %v253
    %861 = vmatmul.mubr.bf16.gmra.mrb[0].mxu0 %v252
    %v862 = vpop.f32.mrb[0].mxu0
    %v863 = vadd.f32 %v823, %v862
    %v864 = vpop.f32.mrb[0].mxu0
    %v865 = vpop.f32.mrb[0].mxu0
    %v866 = vpop.f32.mrb[0].mxu0
    %867 = vdwg.mxu0
    %868 = vmatprep.subr.bf16.mxu0 0
    %869 = vmatpush1.bf16.msra.mxu0 %v636
    %870 = vmatprep.subr.bf16.mxu0 0
    %871 = vmatpush1.bf16.msra.mxu0 %v637
    %872 = vmatprep.subr.bf16.mxu0 0
    %873 = vmatpush1.bf16.msra.mxu0 %v638
    %874 = vmatprep.subr.bf16.mxu0 0
    %875 = vmatpush1.bf16.msra.mxu0 %v639
    %876 = vmatprep.subr.bf16.mxu0 0
    %877 = vmatpush1.bf16.msra.mxu0 %v640
    %878 = vmatprep.subr.bf16.mxu0 0
    %879 = vmatpush1.bf16.msra.mxu0 %v641
    %880 = vmatprep.subr.bf16.mxu0 0
    %881 = vmatpush1.bf16.msra.mxu0 %v642
    %882 = vmatprep.subr.bf16.mxu0 0
    %883 = vmatpush1.bf16.msra.mxu0 %v643
    %884 = vmatprep.subr.bf16.mxu0 0
    %885 = vmatpush1.bf16.msra.mxu0 %v644
    %886 = vmatprep.subr.bf16.mxu0 0
    %887 = vmatpush1.bf16.msra.mxu0 %v645
    %888 = vmatprep.subr.bf16.mxu0 0
    %889 = vmatpush1.bf16.msra.mxu0 %v646
    %890 = vmatprep.subr.bf16.mxu0 0
    %891 = vmatpush1.bf16.msra.mxu0 %v647
    %892 = vmatprep.subr.bf16.mxu0 0
    %893 = vmatpush1.bf16.msra.mxu0 %v648
    %894 = vmatprep.subr.bf16.mxu0 0
    %895 = vmatpush1.bf16.msra.mxu0 %v649
    %896 = vmatprep.subr.bf16.mxu0 0
    %897 = vmatpush1.bf16.msra.mxu0 %v650
    %898 = vmatprep.subr.bf16.mxu0 0
    %899 = vmatpush1.bf16.msra.mxu0 %v651
    %900 = vmatprep.mubr.bf16.mxu0 %v255
    %901 = vmatmul.mubr.bf16.gmra.mrb[0].mxu0 %v254
    %v902 = vpop.f32.mrb[0].mxu0
    %v903 = vadd.f32 %v863, %v902
    %v904 = vpop.f32.mrb[0].mxu0
    %v905 = vpop.f32.mrb[0].mxu0
    %v906 = vpop.f32.mrb[0].mxu0
    %907 = vdwg.mxu0
    %908 = vmatprep.subr.bf16.mxu0 0
    %909 = vmatpush1.bf16.msra.mxu0 %v652
    %910 = vmatprep.subr.bf16.mxu0 0
    %911 = vmatpush1.bf16.msra.mxu0 %v653
    %912 = vmatprep.subr.bf16.mxu0 0
    %913 = vmatpush1.bf16.msra.mxu0 %v654
    %914 = vmatprep.subr.bf16.mxu0 0
    %915 = vmatpush1.bf16.msra.mxu0 %v655
    %916 = vmatprep.subr.bf16.mxu0 0
    %917 = vmatpush1.bf16.msra.mxu0 %v656
    %918 = vmatprep.subr.bf16.mxu0 0
    %919 = vmatpush1.bf16.msra.mxu0 %v657
    %920 = vmatprep.subr.bf16.mxu0 0
    %921 = vmatpush1.bf16.msra.mxu0 %v658
    %922 = vmatprep.subr.bf16.mxu0 0
    %923 = vmatpush1.bf16.msra.mxu0 %v659
    %924 = vmatprep.subr.bf16.mxu0 0
    %925 = vmatpush1.bf16.msra.mxu0 %v660
    %926 = vmatprep.subr.bf16.mxu0 0
    %927 = vmatpush1.bf16.msra.mxu0 %v661
    %928 = vmatprep.subr.bf16.mxu0 0
    %929 = vmatpush1.bf16.msra.mxu0 %v662
    %930 = vmatprep.subr.bf16.mxu0 0
    %931 = vmatpush1.bf16.msra.mxu0 %v663
    %932 = vmatprep.subr.bf16.mxu0 0
    %933 = vmatpush1.bf16.msra.mxu0 %v664
    %934 = vmatprep.subr.bf16.mxu0 0
    %935 = vmatpush1.bf16.msra.mxu0 %v665
    %936 = vmatprep.subr.bf16.mxu0 0
    %937 = vmatpush1.bf16.msra.mxu0 %v666
    %938 = vmatprep.subr.bf16.mxu0 0
    %939 = vmatpush1.bf16.msra.mxu0 %v667
    %940 = vmatprep.mubr.bf16.mxu0 %v257
    %941 = vmatmul.mubr.bf16.gmra.mrb[0].mxu0 %v256
    %v942 = vpop.f32.mrb[0].mxu0
    %v943 = vadd.f32 %v903, %v942
    %v944 = vpop.f32.mrb[0].mxu0
    %v945 = vpop.f32.mrb[0].mxu0
    %v946 = vpop.f32.mrb[0].mxu0
    %947 = vdwg.mxu0
    %v948 = vmax.f32 %v943, 0.0
    %v949 = vpack.c.bf16 %v948, %v948
    %v950 = vld [vmem:[#allocation7] sm:$0xf]
    %v951 = vld [vmem:[#allocation7 + $0x4] sm:$0xf]
    %v952 = vld [vmem:[#allocation7 + $0x8] sm:$0xf]
    %v953 = vld [vmem:[#allocation7 + $0xc] sm:$0xf]
    %v954 = vld [vmem:[#allocation7 + $0x10] sm:$0xf]
    %v955 = vld [vmem:[#allocation7 + $0x14] sm:$0xf]
    %v956 = vld [vmem:[#allocation7 + $0x18] sm:$0xf]
    %v957 = vld [vmem:[#allocation7 + $0x1c] sm:$0xf]
    %v958 = vld [vmem:[#allocation7 + $0x20] sm:$0xf]
    %v959 = vld [vmem:[#allocation7 + $0x24] sm:$0xf]
    %v960 = vld [vmem:[#allocation7 + $0x28] sm:$0xf]
    %v961 = vld [vmem:[#allocation7 + $0x2c] sm:$0xf]
    %v962 = vld [vmem:[#allocation7 + $0x30] sm:$0xf]
    %v963 = vld [vmem:[#allocation7 + $0x34] sm:$0xf]
    %v964 = vld [vmem:[#allocation7 + $0x38] sm:$0xf]
    %v965 = vld [vmem:[#allocation7 + $0x3c] sm:$0xf]
    %v966 = vld [vmem:[%s4] sm:$0x1]
    %v968 = vlaneseq
    %v969 = vshrl.u32 %v968, 7
    %v970 = vsub.s32 0, %v969
    %v971 = vrot.slane %v966, %v970
    %v989 = vunpack.c.l.b16 %v950
    %v990 = vunpack.c.l.b16 %v951
    %v991 = vunpack.c.l.b16 %v952
    %v992 = vunpack.c.l.b16 %v953
    %v993 = vunpack.c.l.b16 %v954
    %v994 = vunpack.c.l.b16 %v955
    %v995 = vunpack.c.l.b16 %v956
    %v996 = vunpack.c.l.b16 %v957
    %v997 = vunpack.c.l.b16 %v958
    %v998 = vunpack.c.l.b16 %v959
    %v999 = vunpack.c.l.b16 %v960
    %v1000 = vunpack.c.l.b16 %v961
    %v1001 = vunpack.c.l.b16 %v962
    %v1002 = vunpack.c.l.b16 %v963
    %v1003 = vunpack.c.l.b16 %v964
    %v1004 = vunpack.c.l.b16 %v965
    %v1005 = vpack.c.b16 %v990, %v989
    %v1006 = vpack.c.b16 %v992, %v991
    %v1007 = vpack.c.b16 %v994, %v993
    %v1008 = vpack.c.b16 %v996, %v995
    %v1009 = vpack.c.b16 %v998, %v997
    %v1010 = vpack.c.b16 %v1000, %v999
    %v1011 = vpack.c.b16 %v1002, %v1001
    %v1012 = vpack.c.b16 %v1004, %v1003
    %1021 = vmatprep.subr.bf16.mxu0 0
    %1022 = vmatpush1.bf16.msra.mxu0 %v1005
    %1023 = vmatprep.subr.bf16.mxu0 0
    %1024 = vmatpush1.bf16.msra.mxu0 %v1006
    %1025 = vmatprep.subr.bf16.mxu0 0
    %1026 = vmatpush1.bf16.msra.mxu0 %v1007
    %1027 = vmatprep.subr.bf16.mxu0 0
    %1028 = vmatpush1.bf16.msra.mxu0 %v1008
    %1029 = vmatprep.subr.bf16.mxu0 0
    %1030 = vmatpush1.bf16.msra.mxu0 %v1009
    %1031 = vmatprep.subr.bf16.mxu0 0
    %1032 = vmatpush1.bf16.msra.mxu0 %v1010
    %1033 = vmatprep.subr.bf16.mxu0 0
    %1034 = vmatpush1.bf16.msra.mxu0 %v1011
    %1035 = vmatprep.subr.bf16.mxu0 0
    %1036 = vmatpush1.bf16.msra.mxu0 %v1012
    %1037 = vmatprep.subr.bf16.mxu0 0
    %1038 = vmatpush1.bf16.msra.mxu0 0
    %1039 = vmatprep.subr.bf16.mxu0 0
    %1040 = vmatpush1.bf16.msra.mxu0 0
    %1041 = vmatprep.subr.bf16.mxu0 0
    %1042 = vmatpush1.bf16.msra.mxu0 0
    %1043 = vmatprep.subr.bf16.mxu0 0
    %1044 = vmatpush1.bf16.msra.mxu0 0
    %1045 = vmatprep.subr.bf16.mxu0 0
    %1046 = vmatpush1.bf16.msra.mxu0 0
    %1047 = vmatprep.subr.bf16.mxu0 0
    %1048 = vmatpush1.bf16.msra.mxu0 0
    %1049 = vmatprep.subr.bf16.mxu0 0
    %1050 = vmatpush1.bf16.msra.mxu0 0
    %1051 = vmatprep.subr.bf16.mxu0 0
    %1052 = vmatpush1.bf16.msra.mxu0 0
    %1053 = vmatprep.mubr.bf16.mxu0 0
    %1054 = vmatmul.mubr.bf16.gmra.mrb[0].mxu0 %v949
    %v1055 = vpop.f32.mrb[0].mxu0
    %v1056 = vadd.f32 %v971, %v1055
    %v1057 = vpop.f32.mrb[0].mxu0
    %v1058 = vpop.f32.mrb[0].mxu0
    %v1059 = vpop.f32.mrb[0].mxu0
    %1060 = vdwg.mxu0
    %1061 = vst [vmem:[#allocation8] sm:$0xff] %v1056
    // Predicated region
    $region34: #{tpu_custom_call.1} parent=1 // pred_check
      _
    $region35: #{tpu_custom_call.1} parent=1 // pred_check_branch
      %1063 = sbr.rel (0) target = $region37
    $region36: #{tpu_custom_call.1} parent=1 // pred_region
      %s1065 = ssub.s32 128, 128
      %1066 = vsyncadd [#allocation4], %s1065
      %s1068 = sshll.u32 [#allocation8], 4
      %s1069 = int_to_ptr.vmem [resolvable:$true] %s1068
      %1071 = dma.vmem_to_hbm [thread:$0]  %s1069, 128, %s5, [#allocation4]
    $region37: #{tpu_custom_call.1} parent=1 // pred_fallthru
      _
    // Predicated region
    $region38: #{tpu_custom_call.1} parent=1 // pred_check
      _
    $region39: #{tpu_custom_call.1} parent=1 // pred_check_branch
      %1073 = sbr.rel (0) target = $region41
    $region40: #{tpu_custom_call.1} parent=1 // pred_region
      %1074 = dma.done [#allocation4], 128
    $region41: #{tpu_custom_call.1} parent=1 // pred_fallthru
      _
    %1075 = vsyncpa [#allocation3], 1
    %1076 = vsyncpa [#allocation6], 1
    %1077 = vsyncpa [#allocation4], 1

</llo_original>
